<compile_context>
chip_gen: v5e
topology: v5e:2x2
jax: 0.10.0
libtpu: 0.0.40
codegen_flags: <defaults>
</compile_context>

<pallas_src>
import functools
import math

import jax
import jax.numpy as jnp
from jax.experimental import pallas as pl
from jax.experimental.pallas import tpu as pltpu


def _taylor_ce_kernel(pred_ref, pred_tgt_ref, out_ref, *, coeffs, n_classes,
                      smoothing, total_batch, batch_tile):
    i = pl.program_id(0)

    x = pred_ref[...].astype(jnp.float32)                  # (TB, C)
    tb = x.shape[0]

    # --- Taylor polynomial in Horner form: fn = c0 + x*(c1 + x*(c2 + ...)) ---
    fn = jnp.full_like(x, coeffs[-1])
    for ck in reversed(coeffs[:-1]):
        fn = fn * x + ck                                    # fn > 0 because n is even

    lf = jnp.log(fn)                                        # (TB, C)  -> EUP
    sum_fn = jnp.sum(fn, axis=-1, keepdims=True)            # (TB, 1)
    sum_lf = jnp.sum(lf, axis=-1, keepdims=True)            # (TB, 1)

    # target term on the pre-gathered (TB,1) logit column -- no (TB,C) iota/cmp/select.
    xt = pred_tgt_ref[...].astype(jnp.float32)              # (TB, 1)
    ft = jnp.full_like(xt, coeffs[-1])
    for ck in reversed(coeffs[:-1]):
        ft = ft * xt + ck
    lf_tgt = jnp.log(ft)                                    # (TB, 1)

    confidence = 1.0 - smoothing
    off = smoothing / (n_classes - 1)

    # closed-form per-row label-smoothed CE on log(taylor_softmax)
    row_loss = jnp.log(sum_fn) - off * sum_lf - (confidence - off) * lf_tgt  # (TB,1)

    # mask rows past the real batch (ragged last block and/or sublane padding):
    # keep this where() -- OOB rows hold unspecified data (log may be NaN/inf).
    row_ids = jax.lax.broadcasted_iota(jnp.int32, (tb, 1), 0) + i * batch_tile
    row_loss = jnp.where(row_ids < total_batch, row_loss, 0.0)

    # per-tile partial sum, written lane-dense; final mean happens in the wrapper.
    tile_sum = jnp.sum(row_loss, axis=(0, 1), keepdims=True)        # (1, 1)
    out_ref[0] = jnp.broadcast_to(tile_sum, (8, 128))


def _round_up(x, m):
    return ((x + m - 1) // m) * m


def _hw_budgets():
    """(per-tile byte budget, vmem scoped-limit cap) gated on the TPU generation."""
    tile_budget, limit_cap = 8 << 20, 32 << 20           # safe everywhere (incl. v7x)
    try:
        cap = int(getattr(pltpu.get_tpu_info(), "vmem_capacity_bytes", 0))
        if cap >= 100 << 20:                              # v5e / v6e: 128 MiB physical
            tile_budget, limit_cap = 16 << 20, 64 << 20
        elif cap > 0:                                     # v7x: 64 MiB per TensorCore
            tile_budget, limit_cap = 12 << 20, 32 << 20
    except Exception:
        pass
    return tile_budget, limit_cap


def _choose_batch_tile(B_eff, C, itemsize, row_align, tile_budget):
    # per-row VMEM bytes of one buffer set: pred row + lane-padded (TB,1) f32 column
    per_row = C * itemsize + 128 * 4
    rows = max(row_align, tile_budget // per_row)
    # keep >= 2 parallel grid tiles when the batch allows (v7x megacore; ~free on v5e/v6e)
    if B_eff >= 2 * row_align:
        rows = min(rows, _round_up((B_eff + 1) // 2, row_align))
    # a block must never exceed the batch extent
    rows = min(rows, (B_eff // row_align) * row_align)
    return max(row_align, (rows // row_align) * row_align)


def taylor_cross_entropy_loss(pred, target, *, n=2, smoothing=0.05, batch_tile=None):
    assert n % 2 == 0
    B, C = pred.shape
    assert C >= 2, "label smoothing needs at least 2 classes"

    itemsize = jnp.dtype(pred.dtype).itemsize
    # sublane packing granularity (8 rows f32, 16 bf16, 32 int8)
    row_align = max(8, 32 // max(itemsize, 1))

    # per-row target logit, gathered once in the wrapper (touches only B elements);
    # replaces the in-kernel (TB,C) gather machinery and the int32 target block.
    tgt = target.astype(jnp.int32)
    pred_tgt = jnp.take_along_axis(pred, tgt[:, None], axis=1)       # (B, 1)

    # Only pad batches smaller than one sublane group; larger batches use ragged last
    # blocks + in-kernel row masking (no whole-tensor HBM copy).
    B_eff = B
    if B < row_align:
        B_eff = row_align
        pred = jnp.pad(pred, ((0, B_eff - B), (0, 0)))
        pred_tgt = jnp.pad(pred_tgt, ((0, B_eff - B), (0, 0)))

    tile_budget, limit_cap = _hw_budgets()
    if batch_tile is None:
        batch_tile = _choose_batch_tile(B_eff, C, itemsize, row_align, tile_budget)
    num_tiles = -(-B_eff // batch_tile)

    # double-buffered pred + lane-padded target column + slack (outputs are ~8 KiB)
    tile_vmem = batch_tile * (C * itemsize + 128 * 4)
    vmem_limit = int(min(limit_cap, max(32 << 20, 2 * tile_vmem + (2 << 20))))

    coeffs = tuple(1.0 / math.factorial(k) for k in range(n + 1))
    kernel = functools.partial(
        _taylor_ce_kernel,
        coeffs=coeffs, n_classes=C, smoothing=float(smoothing),
        total_batch=B, batch_tile=batch_tile,
    )

    partials = pl.pallas_call(
        kernel,
        out_shape=jax.ShapeDtypeStruct((num_tiles, 8, 128), jnp.float32),
        grid_spec=pltpu.PrefetchScalarGridSpec(
            num_scalar_prefetch=0,
            grid=(num_tiles,),
            in_specs=[
                pl.BlockSpec((batch_tile, C), lambda i: (i, 0)),
                pl.BlockSpec((batch_tile, 1), lambda i: (i, 0)),
            ],
            out_specs=pl.BlockSpec((1, 8, 128), lambda i: (i, 0, 0)),
        ),
        compiler_params=pltpu.CompilerParams(
            dimension_semantics=("parallel",),          # independent batch tiles
            vmem_limit_bytes=vmem_limit,
        ),
    )(pred, pred_tgt)

    return jnp.sum(partials[:, 0, 0]) / float(B)


def _reference(pred, target, *, n=2, smoothing=0.05):
    x = pred.astype(jnp.float32)
    fn = jnp.ones_like(x)
    term = jnp.ones_like(x)
    denor = 1.0
    for k in range(1, n + 1):
        denor *= float(k)
        term = term * x
        fn = fn + term / denor
    p = fn / jnp.sum(fn, axis=1, keepdims=True)
    lp = jnp.log(p)
    z = jax.nn.log_softmax(lp, axis=-1)
    C = x.shape[1]
    true_dist = jnp.full_like(z, smoothing / (C - 1))
    one_hot = jax.nn.one_hot(target, C, dtype=z.dtype)
    true_dist = true_dist * (1.0 - one_hot) + one_hot * (1.0 - smoothing)
    return jnp.mean(jnp.sum(-true_dist * z, axis=-1))


if __name__ == "__main__":
    key = jax.random.PRNGKey(0)
    k1, k2, k3, k4, k5, k6 = jax.random.split(key, 6)

    # case 1: aligned batch -> 2 parallel tiles (megacore path)
    B1, C1 = 16, 128
    pred1 = jax.random.normal(k1, (B1, C1), dtype=jnp.float32)
    target1 = jax.random.randint(k2, (B1,), 0, C1, dtype=jnp.int32)
    loss1 = jax.block_until_ready(taylor_cross_entropy_loss(pred1, target1, n=2, smoothing=0.05))
    ref1 = _reference(pred1, target1, n=2, smoothing=0.05)
    assert jnp.allclose(loss1, ref1, rtol=1e-5, atol=1e-5), (loss1, ref1)

    # case 2: unaligned batch -> ragged last block + in-kernel row masking (no pad copy)
    B2, C2 = 10, 64
    pred2 = jax.random.normal(k3, (B2, C2), dtype=jnp.float32)
    target2 = jax.random.randint(k4, (B2,), 0, C2, dtype=jnp.int32)
    loss2 = jax.block_until_ready(taylor_cross_entropy_loss(pred2, target2, n=2, smoothing=0.05))
    ref2 = _reference(pred2, target2, n=2, smoothing=0.05)
    assert jnp.allclose(loss2, ref2, rtol=1e-5, atol=1e-5), (loss2, ref2)

    # case 3: bf16 logits, tiny batch (< one bf16 sublane group -> small pad), n=4
    B3, C3 = 12, 256
    pred3 = jax.random.normal(k5, (B3, C3), dtype=jnp.float32).astype(jnp.bfloat16)
    target3 = jax.random.randint(k6, (B3,), 0, C3, dtype=jnp.int32)
    loss3 = jax.block_until_ready(taylor_cross_entropy_loss(pred3, target3, n=4, smoothing=0.1))
    ref3 = _reference(pred3, target3, n=4, smoothing=0.1)
    assert jnp.allclose(loss3, ref3, rtol=1e-5, atol=1e-5), (loss3, ref3)

    print("KERNEL_OK")
</pallas_src>

<mosaic_0001>
module attributes {stable_mosaic.version = 11 : i64} {
  func.func @_taylor_ce_kernel(%arg0: i32, %arg1: memref<8x128xf32, #tpu.memory_space<vmem>>, %arg2: memref<8x1xf32, #tpu.memory_space<vmem>>, %arg3: memref<1x8x128xf32, #tpu.memory_space<vmem>>) attributes {dimension_semantics = [#tpu.dimension_semantics<parallel>], iteration_bounds = array<i64: 2>, scalar_prefetch = 0 : i64, scratch_operands = 0 : i64, tpu.core_type = #tpu.core_type<tc>, window_params = [{transform_indices = @transform_0, window_bounds = array<i64: 8, 128>}, {transform_indices = @transform_1, window_bounds = array<i64: 8, 1>}, {transform_indices = @transform_2, window_bounds = array<i64: 1, 8, 128>}]} {
    %c0 = arith.constant 0 : index
    %c0_0 = arith.constant 0 : index
    %0 = vector.load %arg1[%c0, %c0_0] : memref<8x128xf32, #tpu.memory_space<vmem>>, vector<8x128xf32>
    %cst = arith.constant 5.000000e-01 : f32
    %1 = vector.broadcast %cst : f32 to vector<8x128xf32>
    %2 = arith.mulf %1, %0 : vector<8x128xf32>
    %cst_1 = arith.constant 1.000000e+00 : f32
    %3 = vector.broadcast %cst_1 : f32 to vector<8x128xf32>
    %4 = arith.addf %2, %3 : vector<8x128xf32>
    %5 = arith.mulf %4, %0 : vector<8x128xf32>
    %cst_2 = arith.constant 1.000000e+00 : f32
    %6 = vector.broadcast %cst_2 : f32 to vector<8x128xf32>
    %7 = arith.addf %5, %6 : vector<8x128xf32>
    %8 = math.log %7 : vector<8x128xf32>
    %cst_3 = arith.constant dense<0.000000e+00> : vector<8xf32>
    %9 = vector.multi_reduction <add>, %7, %cst_3 [1] : vector<8x128xf32> to vector<8xf32>
    %10 = vector.shape_cast %9 : vector<8xf32> to vector<8x1xf32>
    %cst_4 = arith.constant dense<0.000000e+00> : vector<8xf32>
    %11 = vector.multi_reduction <add>, %8, %cst_4 [1] : vector<8x128xf32> to vector<8xf32>
    %12 = vector.shape_cast %11 : vector<8xf32> to vector<8x1xf32>
    %c0_5 = arith.constant 0 : index
    %c0_6 = arith.constant 0 : index
    %13 = vector.load %arg2[%c0_5, %c0_6] : memref<8x1xf32, #tpu.memory_space<vmem>>, vector<8x1xf32>
    %cst_7 = arith.constant 5.000000e-01 : f32
    %14 = vector.broadcast %cst_7 : f32 to vector<8x1xf32>
    %15 = arith.mulf %14, %13 : vector<8x1xf32>
    %cst_8 = arith.constant 1.000000e+00 : f32
    %16 = vector.broadcast %cst_8 : f32 to vector<8x1xf32>
    %17 = arith.addf %15, %16 : vector<8x1xf32>
    %18 = arith.mulf %17, %13 : vector<8x1xf32>
    %cst_9 = arith.constant 1.000000e+00 : f32
    %19 = vector.broadcast %cst_9 : f32 to vector<8x1xf32>
    %20 = arith.addf %18, %19 : vector<8x1xf32>
    %21 = math.log %20 : vector<8x1xf32>
    %22 = math.log %10 : vector<8x1xf32>
    %cst_10 = arith.constant 3.93700786E-4 : f32
    %23 = vector.broadcast %cst_10 : f32 to vector<8x1xf32>
    %24 = arith.mulf %23, %12 : vector<8x1xf32>
    %25 = arith.subf %22, %24 : vector<8x1xf32>
    %cst_11 = arith.constant 0.949606299 : f32
    %26 = vector.broadcast %cst_11 : f32 to vector<8x1xf32>
    %27 = arith.mulf %26, %21 : vector<8x1xf32>
    %28 = arith.subf %25, %27 : vector<8x1xf32>
    %29 = tpu.iota {dimensions = array<i32: 0>} : vector<8x1xi32>
    %c8_i32 = arith.constant 8 : i32
    %30 = arith.muli %arg0, %c8_i32 : i32
    %31 = vector.broadcast %30 : i32 to vector<8x1xi32>
    %32 = arith.addi %29, %31 : vector<8x1xi32>
    %c16_i32 = arith.constant 16 : i32
    %33 = vector.broadcast %c16_i32 : i32 to vector<8x1xi32>
    %34 = arith.cmpi slt, %32, %33 : vector<8x1xi32>
    %cst_12 = arith.constant 0.000000e+00 : f32
    %35 = vector.broadcast %cst_12 : f32 to vector<8x1xf32>
    %36 = arith.select %34, %28, %35 : vector<8x1xi1>, vector<8x1xf32>
    %37 = vector.shape_cast %36 : vector<8x1xf32> to vector<1x8x1xf32>
    %cst_13 = arith.constant dense<0.000000e+00> : vector<1xf32>
    %38 = vector.multi_reduction <add>, %37, %cst_13 [1, 2] : vector<1x8x1xf32> to vector<1xf32>
    %39 = vector.shape_cast %38 : vector<1xf32> to vector<1x1x1xf32>
    %40 = vector.extract %39[0, 0, 0] : f32 from vector<1x1x1xf32>
    %41 = vector.broadcast %40 : f32 to vector<1x1xf32>
    %42 = vector.shape_cast %41 : vector<1x1xf32> to vector<1x1xf32>
    %43 = vector.broadcast %42 : vector<1x1xf32> to vector<8x128xf32>
    %c0_14 = arith.constant 0 : index
    %c0_15 = arith.constant 0 : index
    %c0_16 = arith.constant 0 : index
    %44 = vector.load %arg3[%c0_14, %c0_15, %c0_16] : memref<1x8x128xf32, #tpu.memory_space<vmem>>, vector<1x8x128xf32>
    %45 = vector.shape_cast %44 : vector<1x8x128xf32> to vector<8x128xf32>
    %46 = vector.shape_cast %43 : vector<8x128xf32> to vector<1x8x128xf32>
    tpu.vector_store %arg3[%c0_14, %c0_15, %c0_16], %46 {strides = array<i32>} : memref<1x8x128xf32, #tpu.memory_space<vmem>>, vector<1x8x128xf32>,
    return
  }
  func.func @transform_0(%arg0: i32) -> (i32, i32) {
    %c0_i32 = arith.constant 0 : i32
    %c0_i32_0 = arith.constant 0 : i32
    return %arg0, %c0_i32 : i32, i32
  }
  func.func @transform_1(%arg0: i32) -> (i32, i32) {
    %c0_i32 = arith.constant 0 : i32
    %c0_i32_0 = arith.constant 0 : i32
    return %arg0, %c0_i32 : i32, i32
  }
  func.func @transform_2(%arg0: i32) -> (i32, i32, i32) {
    %c0_i32 = arith.constant 0 : i32
    %c0_i32_0 = arith.constant 0 : i32
    %c0_i32_1 = arith.constant 0 : i32
    return %arg0, %c0_i32, %c0_i32_0 : i32, i32, i32
  }
}

</mosaic_0001>

<llo_original>
// kernel: tpu_custom_call.1
$region0: #{tpu_custom_call.1}
  #allocation0 [shape = 'u32[]', space=smem, size = 0x4, offset = 0x4, fixed_abs, tag = 'smem constant byte address 0x4 - core index']
  #allocation1 [shape = 'u32[72,128]{1,0:T(1,128)}', space=vmem, size = 0x9000, scoped, tag = 'internal scratch']
  %s0 = inlined_call_operand.vmem [shape: f32[16,128], index: 0, kind: input, shape index: {}]
  %s1 = inlined_call_operand.vmem [shape: f32[16,1], index: 1, kind: input, shape index: {}]
  %s2 = inlined_call_operand.hbm [shape: f32[2,8,128], index: 2, kind: output, shape index: {}]
  %s3 = sld [smem:[#allocation0]]
  $region41: #{tpu_custom_call.1} parent=0
    _
  %s5 = ssub.s32 1, %s3
  %s6 = scalar_select 0, %s5, %s3
  $region1: #{tpu_custom_call.1} parent=0
    #allocation2 [shape = 'u8[8192]{0}', space=vmem, size = 0x2000, scoped, tag = 'output window, operand 0']
    #allocation3 [shape = 's32[2]{0}', space=sflag, size = 0x8, scoped, tag = 'scoped memory for tpu_custom_call.1']
    %7 = vsyncpa [#allocation3], 0
    %s8 = scalar_lea.sflag [#allocation3], 1
    %9 = vsyncpa %s8, 0
    loop: start=0, step=1, limit=4
    $region2: #{tpu_custom_call.1} parent=1 // loop_pre_header
      _
    $region3: #{tpu_custom_call.1} parent=1 // loop_header
      %s11 = sphi 0, %s15
      %p12 = scmp.ge.s32.totalorder %s11, 4
      %s21 = sphi 0, %s23
      %s24 = sphi 0, %s21
      %s25 = sphi 0, %s24
      %s41 = sphi 0, %s25
      %s47 = sphi 0, %s49
      %s50 = sphi 0, %s47
      %s51 = sphi 0, %s50
      %s67 = sphi 0, %s51
      %s73 = sphi 0, %s75
      %s76 = sphi 0, %s73
      %s77 = sphi 0, %s76
      %s93 = sphi 0, %s77
    $region4: #{tpu_custom_call.1} parent=1 // loop_header_branch
      %14 = sbr.rel (%p12) target = $region8
    $region5: #{tpu_custom_call.1} parent=1 // loop_body
      %s16 = ssub.s32 %s11, 1
      %s17 = ssub.s32 %s11, 2
      %s18 = sadd.s32 %s11, 1
      %s19 = ssub.s32 %s11, %s18
      %p20 = scmp.eq.s32.totalorder %s19, 0
      %s22 = sadd.s32 %s21, 1
      %s23 = scalar_select %p20, %s21, %s22
      %p26 = pneg %p20
      %p27 = scmp.eq.s32.totalorder %s11, 1
      %p28 = por %p26, %p27
      %p29 = scmp.ne.s32.totalorder %s21, %s24
      %p30 = scmp.eq.s32.totalorder %s11, 0
      %p31 = por %p29, %p30
      %p32 = scmp.ne.s32.totalorder %s21, %s24
      %p33 = scmp.eq.s32.totalorder %s16, 1
      %p34 = por %p32, %p33
      %p35 = scmp.ne.s32.totalorder %s24, %s25
      %p36 = scmp.eq.s32.totalorder %s16, 0
      %p37 = por %p35, %p36
      %p38 = scmp.ne.s32.totalorder %s24, %s25
      %p39 = scmp.eq.s32.totalorder %s17, 1
      %p40 = por %p38, %p39
      %p42 = scmp.ne.s32.totalorder %s25, %s41
      %p43 = scmp.eq.s32.totalorder %s17, 0
      %p44 = por %p42, %p43
      %s45 = ssub.s32 %s11, %s18
      %p46 = scmp.eq.s32.totalorder %s45, 0
      %s48 = sadd.s32 %s47, 1
      %s49 = scalar_select %p46, %s47, %s48
      %p52 = pneg %p46
      %p53 = scmp.eq.s32.totalorder %s11, 1
      %p54 = por %p52, %p53
      %p55 = scmp.ne.s32.totalorder %s47, %s50
      %p56 = scmp.eq.s32.totalorder %s11, 0
      %p57 = por %p55, %p56
      %p58 = scmp.ne.s32.totalorder %s47, %s50
      %p59 = scmp.eq.s32.totalorder %s16, 1
      %p60 = por %p58, %p59
      %p61 = scmp.ne.s32.totalorder %s50, %s51
      %p62 = scmp.eq.s32.totalorder %s16, 0
      %p63 = por %p61, %p62
      %p64 = scmp.ne.s32.totalorder %s50, %s51
      %p65 = scmp.eq.s32.totalorder %s17, 1
      %p66 = por %p64, %p65
      %p68 = scmp.ne.s32.totalorder %s51, %s67
      %p69 = scmp.eq.s32.totalorder %s17, 0
      %p70 = por %p68, %p69
      %s71 = ssub.s32 %s11, %s18
      %p72 = scmp.eq.s32.totalorder %s71, 0
      %s74 = sadd.s32 %s73, 1
      %s75 = scalar_select %p72, %s73, %s74
      %p78 = pneg %p72
      %p79 = scmp.eq.s32.totalorder %s11, 1
      %p80 = por %p78, %p79
      %p81 = scmp.ne.s32.totalorder %s73, %s76
      %p82 = scmp.eq.s32.totalorder %s11, 0
      %p83 = por %p81, %p82
      %p84 = scmp.ne.s32.totalorder %s73, %s76
      %p85 = scmp.eq.s32.totalorder %s16, 1
      %p86 = por %p84, %p85
      %p87 = scmp.ne.s32.totalorder %s76, %s77
      %p88 = scmp.eq.s32.totalorder %s16, 0
      %p89 = por %p87, %p88
      %p90 = scmp.ne.s32.totalorder %s76, %s77
      %p91 = scmp.eq.s32.totalorder %s17, 1
      %p92 = por %p90, %p91
      %p94 = scmp.ne.s32.totalorder %s77, %s93
      %p95 = scmp.eq.s32.totalorder %s17, 0
      %p96 = por %p94, %p95
      %p97 = scmp.le.s32.totalorder 1, %s11
      %p98 = scmp.lt.s32.totalorder %s11, 3
      %p99 = pnand %p97, %p98
      %p100 = pneg %p99
      // Predicated region
      $region9: #{tpu_custom_call.1} parent=5 // pred_check
        _
      $region10: #{tpu_custom_call.1} parent=5 // pred_check_branch
        %102 = sbr.rel (%p99) target = $region12
      $region11: #{tpu_custom_call.1} parent=5 // pred_region
        %s103 = ssub.s32 %s11, 1
      $region12: #{tpu_custom_call.1} parent=5 // pred_fallthru
        _
      %p104 = scmp.lt.s32.totalorder %s11, 2
      // Predicated region
      $region13: #{tpu_custom_call.1} parent=5 // pred_check
        %p105 = pneg %p104
      $region14: #{tpu_custom_call.1} parent=5 // pred_check_branch
        %107 = sbr.rel (%p105) target = $region16
      $region15: #{tpu_custom_call.1} parent=5 // pred_region
        // Predicated region
        $region17: #{tpu_custom_call.1} parent=15 // pred_check
          %p108 = pneg %p31
        $region18: #{tpu_custom_call.1} parent=15 // pred_check_branch
          %110 = sbr.rel (%p108) target = $region20
        $region19: #{tpu_custom_call.1} parent=15 // pred_region
          %p111 = scmp.lt.s32.totalorder %s11, 1
          %s112 = scalar_select %p111, %s11, 1
          %s113 = smul.addr %s112, 8
          %s114 = scalar_lea.vmem %s0, %s113
        $region20: #{tpu_custom_call.1} parent=15 // pred_fallthru
          _
        // Predicated region
        $region21: #{tpu_custom_call.1} parent=15 // pred_check
          %p115 = pneg %p57
        $region22: #{tpu_custom_call.1} parent=15 // pred_check_branch
          %117 = sbr.rel (%p115) target = $region24
        $region23: #{tpu_custom_call.1} parent=15 // pred_region
          %p118 = scmp.lt.s32.totalorder %s11, 1
          %s119 = scalar_select %p118, %s11, 1
          %s120 = smul.addr %s119, 8
          %s121 = scalar_lea.vmem %s1, %s120
        $region24: #{tpu_custom_call.1} parent=15 // pred_fallthru
          _
      $region16: #{tpu_custom_call.1} parent=5 // pred_fallthru
        _
      %p122 = scmp.le.s32.totalorder 1, %s11
      %p123 = scmp.lt.s32.totalorder %s11, 3
      %p124 = pnand %p122, %p123
      %p125 = pneg %p124
      // Predicated region
      $region25: #{tpu_custom_call.1} parent=5 // pred_check
        _
      $region26: #{tpu_custom_call.1} parent=5 // pred_check_branch
        %127 = sbr.rel (%p124) target = $region28
      $region27: #{tpu_custom_call.1} parent=5 // pred_region
        %s128 = ssub.s32 %s11, 1
        %p129 = scmp.lt.s32.totalorder %s16, 1
        %s130 = scalar_select %p129, %s16, 1
        %s131 = smul.addr %s130, 8
        %s132 = scalar_lea.vmem %s0, %s131
        %p133 = pneg %p37
        %p134 = pneg %p34
        %p135 = scmp.lt.s32.totalorder %s16, 1
        %s136 = scalar_select %p135, %s16, 1
        %s137 = smul.addr %s136, 8
        %s138 = scalar_lea.vmem %s1, %s137
        %p139 = pneg %p63
        %p140 = pneg %p60
        %p141 = pneg %p89
        %p142 = pneg %p86
        %s143 = sand.u32 %s76, 1
        %s144 = scalar_lea.sflag [#allocation3], %s143
        %s145 = sand.u32 %s76, 1
        %s146 = smul.addr %s145, 8
        %s147 = scalar_lea.vmem [#allocation2], %s146
        %p148 = scmp.lt.s32.totalorder %s16, 1
        %s149 = scalar_select %p148, %s16, 1
        %s150 = smul.addr %s149, 8
        %s151 = scalar_lea.vmem %s0, %s150
        %p152 = scmp.lt.s32.totalorder %s16, 1
        %s153 = scalar_select %p152, %s16, 1
        %s154 = smul.addr %s153, 8
        %s155 = scalar_lea.vmem %s1, %s154
        %v156 = vld [vmem:[%s151] sm:$0xff]
        %v157 = vmul.f32 %v156, 0.5
        %v158 = vadd.f32 %v157, 1.0
        %v159 = vmul.f32 %v158, %v156
        %v160 = vadd.f32 %v159, 1.0
        %v161 = vlog2.pop %v160
        %v162 = vmul.f32 %v161, 0.6931472
        %163 = vadd.xlane.f32.xlu0 %v160
        %v164 = vpop.xlane.xlu0 %163
        %165 = vadd.xlane.f32.xlu0 %v162
        %v166 = vpop.xlane.xlu0 %165
        %v167 = vld [vmem:[%s155] sm:$0xff]
        %v168 = vmul.f32 %v167, 0.5
        %v169 = vadd.f32 %v168, 1.0
        %v170 = vmul.f32 %v169, %v167
        %v171 = vadd.f32 %v170, 1.0
        %v172 = vlog2.pop %v171
        %v173 = vmul.f32 %v172, 0.6931472
        %v174 = vlog2.pop %v164
        %v175 = vmul.f32 %v174, 0.6931472
        %v176 = vmul.f32 %v166, 0.0003937008
        %v177 = vsub.f32 %v175, %v176
        %v178 = vmul.f32 %v173, 0.9496063
        %v179 = vsub.f32 %v177, %v178
        %v180 = vlaneseq
        %v181 = vshrl.u32 %v180, 7
        %s182 = smul.u32 %s16, 8
        %v183 = vstv %s182
        %v184 = vadd.s32 %v181, %v183
        %vm185 = vcmp.lt.s32.totalorder %v184, 16
        %v186 = vsel %vm185, %v179, 0.0
        %vm187 = vcmask 7168
        %v188 = vsel %vm187, %v186, 0.0
        %189 = vadd.xlane.f32.xlu0 %v188
        %v190 = vpop.xlane.xlu0 %189
        %v191 = vrot.slane %v190, 4
        %v192 = vadd.f32 %v190, %v191
        %v193 = vrot.slane %v192, 2
        %v194 = vadd.f32 %v192, %v193
        %v195 = vrot.slane %v194, 1
        %v196 = vadd.f32 %v194, %v195
        %s197 = vtos %v196
        %v198 = vstv %s197
        %199 = vst [vmem:[%s147] sm:$0xff] %v198
        %s200 = sand.u32 %s76, 1
        %s201 = scalar_lea.sflag [#allocation3], %s200
        %s202 = sand.u32 %s76, 1
        %s203 = smul.addr %s202, 8
        %s204 = scalar_lea.vmem [#allocation2], %s203
        // Predicated region
        $region29: #{tpu_custom_call.1} parent=27 // pred_check
          %p205 = pneg %p86
        $region30: #{tpu_custom_call.1} parent=27 // pred_check_branch
          %207 = sbr.rel (%p205) target = $region32
        $region31: #{tpu_custom_call.1} parent=27 // pred_region
          %209 = vsyncadd %s201, 0
          %s210 = smul.addr %s16, 8
          %s211 = scalar_lea.hbm %s2, %s210
          %s213 = sshll.u32 %s204, 4
          %s214 = int_to_ptr.vmem [resolvable:$true] %s213
          %s215 = sshll.u32 %s211, 4
          %s216 = int_to_ptr.hbm [resolvable:$true] %s215
          %218 = dma.vmem_to_hbm [thread:$0]  %s214, 128, %s216, %s201
        $region32: #{tpu_custom_call.1} parent=27 // pred_fallthru
          _
      $region28: #{tpu_custom_call.1} parent=5 // pred_fallthru
        _
      %p219 = scmp.le.s32.totalorder 2, %s11
      // Predicated region
      $region33: #{tpu_custom_call.1} parent=5 // pred_check
        %p220 = pneg %p219
      $region34: #{tpu_custom_call.1} parent=5 // pred_check_branch
        %222 = sbr.rel (%p220) target = $region36
      $region35: #{tpu_custom_call.1} parent=5 // pred_region
        %s223 = ssub.s32 %s11, 2
        // Predicated region
        $region37: #{tpu_custom_call.1} parent=35 // pred_check
          %p224 = pneg %p92
        $region38: #{tpu_custom_call.1} parent=35 // pred_check_branch
          %226 = sbr.rel (%p224) target = $region40
        $region39: #{tpu_custom_call.1} parent=35 // pred_region
          %s227 = sand.u32 %s77, 1
          %s228 = scalar_lea.sflag [#allocation3], %s227
          %s229 = sand.u32 %s77, 1
          %s230 = smul.addr %s229, 8
          %s231 = scalar_lea.vmem [#allocation2], %s230
          %233 = dma.done %s228, 128
        $region40: #{tpu_custom_call.1} parent=35 // pred_fallthru
          _
      $region36: #{tpu_custom_call.1} parent=5 // pred_fallthru
        _
    $region6: #{tpu_custom_call.1} parent=1 // loop_footer
      %s15 = sadd.s32 1, %s11
    $region7: #{tpu_custom_call.1} parent=1 // loop_footer_branch
      %10 = sbr.rel target = $region3
    $region8: #{tpu_custom_call.1} parent=1 // loop_exit
      _
    %234 = vsyncpa [#allocation3], 1
    %s235 = scalar_lea.sflag [#allocation3], 1
    %236 = vsyncpa %s235, 1

</llo_original>
